<compile_context>
chip_gen: v7x
topology: tpu7x:2x2x1
jax: 0.10.0
libtpu: 0.0.40
codegen_flags: <defaults>
</compile_context>

<pallas_src>
import functools
import math

import jax
import jax.numpy as jnp
import numpy as np
from jax.experimental import pallas as pl
from jax.experimental.pallas import tpu as pltpu

_LANE = 128


def _sce_kernel(x_ref, t_ref, o_ref, acc_ref, *, num_classes, alpha, rce_scale,
                tile_rows, tiles_per_core, valid_pixels):
    """One grid step = one (batch, core-chunk, pixel-tile) triple.

    x_ref:   (1, C, S, 128) logits (any float dtype; cast to f32 in-kernel)
    t_ref:   (1, S, 128) int32 class ids
    o_ref:   (1, 1, 128) f32 lane-dense partial sums (written at last tile)
    acc_ref: (S, 128) f32 scratch accumulator, resident across the tile axis
    """
    c = pl.program_id(1)
    j = pl.program_id(2)

    @pl.when(j == 0)
    def _():
        acc_ref[...] = jnp.zeros_like(acc_ref)

    x = x_ref[0].astype(jnp.float32)          # (C, S, 128)
    t = t_ref[0]                              # (S, 128) int32

    # Validity mask for this tile: global pixel index < H*W.  Covers the
    # partial last tile, the lane-remainder pad and fully out-of-range tiles
    # of an uneven core split (their contributions become exactly 0).
    tile_idx = c * tiles_per_core + j
    row_iota = jax.lax.broadcasted_iota(jnp.int32, (tile_rows, _LANE), 0)
    lane_iota = jax.lax.broadcasted_iota(jnp.int32, (tile_rows, _LANE), 1)
    pix = (tile_idx * tile_rows + row_iota) * _LANE + lane_iota
    valid = pix < valid_pixels                # (S, 128) bool

    # softmax / log-softmax over the channel (leading) axis: dense (S,128)
    # elementwise reductions on the VPU; exps on the EUP.
    m = jnp.max(x, axis=0)                    # (S, 128)
    e = jnp.exp(x - m[None])                  # (C, S, 128)
    denom = jnp.sum(e, axis=0)                # (S, 128)
    logdenom = jnp.log(denom)
    recip = pl.reciprocal(denom, approx=True)
    recip = recip * (2.0 - denom * recip)     # one Newton step (~2^-24 rel err)

    # x[target] via a select against a channel iota (no float one-hot slab).
    cls = jax.lax.broadcasted_iota(jnp.int32, (num_classes, _LANE), 0)  # (C,128)
    eq = cls[:, None, :] == t[None]                                     # (C,S,128)
    x_t = jnp.sum(jnp.where(eq, x, 0.0), axis=0)                        # (S,128)

    # CrossEntropy per pixel: -log softmax(x)[target] = m + log(denom) - x[target]
    ce = m + logdenom - x_t

    # Reverse CE per pixel:
    #   -sum_c clamp(p_c,1e-7,1) * log(clamp(onehot_c,1e-4,1))
    #   = -log(1e-4) * sum_{c != target} max(p_c, 1e-7)
    #   = -log(1e-4) * recip * (sum_c max(e_c, thr) - max(e_t, thr)),
    #     thr = 1e-7 * denom   (upper clamp never binds: softmax <= 1)
    thr = 1e-7 * denom                                    # (S, 128)
    clamped_sum = jnp.sum(jnp.maximum(e, thr[None]), axis=0)
    e_t = jnp.exp(x_t - m)
    rce = recip * (clamped_sum - jnp.maximum(e_t, thr))

    contrib = alpha * ce + rce_scale * rce
    acc_ref[...] += jnp.where(valid, contrib, 0.0)

    @pl.when(j == pl.num_programs(2) - 1)
    def _():
        # lane-dense (1,1,128) partial; cross-lane reduce happens in the wrapper.
        o_ref[...] = jnp.sum(acc_ref[...], axis=0, keepdims=True)[None]


def _round_up(a, b):
    return ((a + b - 1) // b) * b


def _cdiv(a, b):
    return (a + b - 1) // b


def _pick_vmem_limit():
    phys = None
    try:
        info = pltpu.get_tpu_info()
        phys = getattr(info, "vmem_capacity_bytes", None)
    except Exception:
        phys = None
    if not phys:
        phys = 64 * 1024 * 1024
    # Half the physical VMEM, clamped to [32, 64] MiB:
    #   v5e/v6e (128 MiB physical) -> 64 MiB, v7x (64 MiB physical) -> 32 MiB.
    return int(min(max(phys // 2, 32 * 1024 * 1024), 64 * 1024 * 1024))


def sce_loss(logits_nchw, target, *, alpha=1.0, beta=1.0):
    """logits_nchw: (B, C, H, W) float (f32/bf16); target: (B, H, W) int in [0, C)."""
    B, C, H, W = logits_nchw.shape
    HW = H * W
    HW_pad = _round_up(HW, _LANE)
    rows = HW_pad // _LANE

    x = logits_nchw.reshape(B, C, HW)
    t = target.reshape(B, HW).astype(jnp.int32)
    if HW_pad != HW:
        # TODO(synk): fuse this lane-remainder pad into the producer; only hit
        # when H*W % 128 != 0 (padded pixels are masked in-kernel).
        x = jnp.pad(x, ((0, 0), (0, 0), (0, HW_pad - HW)))
        t = jnp.pad(t, ((0, 0), (0, HW_pad - HW)))
    x = x.reshape(B, C, rows, _LANE)
    t = t.reshape(B, rows, _LANE)

    in_itemsize = jnp.dtype(x.dtype).itemsize
    align = 16 if in_itemsize < 4 else 8      # bf16 sublane packing is (16,128)

    vmem_limit = _pick_vmem_limit()
    budget = vmem_limit * 3 // 4              # headroom for compiler scratch
    # Bytes of VMEM per sublane row of 128 pixels: double-buffered logits +
    # target blocks, ~3 simultaneously-live (C, S, 128) f32 temporaries, and
    # the f32 accumulator scratch.
    bytes_per_row = (2 * C * _LANE * in_itemsize + 2 * _LANE * 4
                     + 3 * C * _LANE * 4 + _LANE * 4)
    s_cap = max(align, (budget // bytes_per_row) // align * align)

    n_tiles_target = _cdiv(rows, s_cap)
    if n_tiles_target <= 1:
        S = rows                              # full-dim block: always layout-legal
        num_tiles = 1
    else:
        S = _round_up(_cdiv(rows, n_tiles_target), align)   # balanced tiles
        num_tiles = _cdiv(rows, S)

    # Split the tile axis into 2 "parallel" core chunks so v7x's second
    # TensorCore gets work even at B == 1 (harmless on v5e/v6e).
    NC = 2 if num_tiles >= 2 else 1
    T2 = _cdiv(num_tiles, NC)
    last_blk = num_tiles - 1

    kernel = functools.partial(
        _sce_kernel,
        num_classes=C,
        alpha=float(alpha),
        rce_scale=float(beta) * float(-math.log(1e-4)),
        tile_rows=S,
        tiles_per_core=T2,
        valid_pixels=HW,
    )

    def x_map(b, c, j):
        return (b, 0, jnp.minimum(c * T2 + j, last_blk), 0)

    def t_map(b, c, j):
        return (b, jnp.minimum(c * T2 + j, last_blk), 0)

    partials = pl.pallas_call(
        kernel,
        out_shape=jax.ShapeDtypeStruct((B, NC, _LANE), jnp.float32),
        grid_spec=pltpu.PrefetchScalarGridSpec(
            num_scalar_prefetch=0,
            grid=(B, NC, T2),
            in_specs=[
                pl.BlockSpec((1, C, S, _LANE), x_map),
                pl.BlockSpec((1, S, _LANE), t_map),
            ],
            out_specs=pl.BlockSpec((1, 1, _LANE), lambda b, c, j: (b, c, 0)),
            scratch_shapes=[pltpu.VMEM((S, _LANE), jnp.float32)],
        ),
        compiler_params=pltpu.CompilerParams(
            dimension_semantics=("parallel", "parallel", "arbitrary"),
            vmem_limit_bytes=vmem_limit,
        ),
    )(x, t)

    # mean over the B*H*W (unpadded) pixels, applied once outside the kernel.
    return jnp.sum(partials) / jnp.float32(B * HW)


def _reference_sce(logits, target, alpha=1.0, beta=1.0):
    """Pure-JAX reference matching the PyTorch SCELoss.forward semantics."""
    B, C, H, W = logits.shape
    logits = logits.astype(jnp.float32)
    logp = jax.nn.log_softmax(logits, axis=1)
    ce = jnp.mean(-jnp.take_along_axis(logp, target[:, None, :, :], axis=1))
    p = jnp.clip(jax.nn.softmax(logits, axis=1), 1e-7, 1.0)
    oh = jax.nn.one_hot(target, C, dtype=jnp.float32)        # (B, H, W, C)
    oh = jnp.transpose(oh, (0, 3, 1, 2))                     # (B, C, H, W)
    oh = jnp.clip(oh, 1e-4, 1.0)
    rce = -jnp.sum(p * jnp.log(oh), axis=1)                  # (B, H, W)
    return alpha * ce + beta * jnp.mean(rce)


if __name__ == "__main__":
    B, C, H, W = 2, 4, 16, 16
    key = jax.random.PRNGKey(0)
    k1, k2 = jax.random.split(key)
    logits = jax.random.normal(k1, (B, C, H, W), dtype=jnp.float32)
    target = jax.random.randint(k2, (B, H, W), 0, C, dtype=jnp.int32)

    loss = jax.block_until_ready(sce_loss(logits, target, alpha=1.0, beta=1.0))
    ref = jax.block_until_ready(_reference_sce(logits, target, alpha=1.0, beta=1.0))

    np.testing.assert_allclose(np.asarray(loss), np.asarray(ref), rtol=1e-4, atol=1e-5)
    print("KERNEL_OK")
</pallas_src>

<mosaic_0001>
module attributes {stable_mosaic.version = 11 : i64} {
  func.func @_sce_kernel(%arg0: i32, %arg1: i32, %arg2: i32, %arg3: memref<1x4x2x128xf32, #tpu.memory_space<vmem>>, %arg4: memref<1x2x128xi32, #tpu.memory_space<vmem>>, %arg5: memref<1x1x128xf32, #tpu.memory_space<vmem>>, %arg6: memref<2x128xf32, #tpu.memory_space<vmem>>) attributes {dimension_semantics = [#tpu.dimension_semantics<parallel>, #tpu.dimension_semantics<parallel>, #tpu.dimension_semantics<arbitrary>], iteration_bounds = array<i64: 2, 1, 1>, scalar_prefetch = 0 : i64, scratch_operands = 1 : i64, tpu.core_type = #tpu.core_type<tc>, window_params = [{transform_indices = @transform_0, window_bounds = array<i64: 1, 4, 2, 128>}, {transform_indices = @transform_1, window_bounds = array<i64: 1, 2, 128>}, {transform_indices = @transform_2, window_bounds = array<i64: 1, 1, 128>}]} {
    %c0_i32 = arith.constant 0 : i32
    %0 = arith.cmpi eq, %arg2, %c0_i32 : i32
    %1 = arith.extui %0 : i1 to i32
    %c0_i32_0 = arith.constant 0 : i32
    %2 = arith.cmpi ne, %1, %c0_i32_0 : i32
    scf.if %2 {
      %cst_22 = arith.constant 0.000000e+00 : f32
      %66 = vector.broadcast %cst_22 : f32 to vector<2x128xf32>
      %c0_23 = arith.constant 0 : index
      %c0_24 = arith.constant 0 : index
      %67 = vector.load %arg6[%c0_23, %c0_24] : memref<2x128xf32, #tpu.memory_space<vmem>>, vector<2x128xf32>
      tpu.vector_store %arg6[%c0_23, %c0_24], %66 {strides = array<i32>} : memref<2x128xf32, #tpu.memory_space<vmem>>, vector<2x128xf32>,
    } else {
    }
    %c0 = arith.constant 0 : index
    %c0_1 = arith.constant 0 : index
    %c0_2 = arith.constant 0 : index
    %c0_3 = arith.constant 0 : index
    %3 = vector.load %arg3[%c0, %c0_1, %c0_2, %c0_3] : memref<1x4x2x128xf32, #tpu.memory_space<vmem>>, vector<1x4x2x128xf32>
    %4 = vector.shape_cast %3 : vector<1x4x2x128xf32> to vector<4x2x128xf32>
    %c0_4 = arith.constant 0 : index
    %c0_5 = arith.constant 0 : index
    %c0_6 = arith.constant 0 : index
    %5 = vector.load %arg4[%c0_4, %c0_5, %c0_6] : memref<1x2x128xi32, #tpu.memory_space<vmem>>, vector<1x2x128xi32>
    %6 = vector.shape_cast %5 : vector<1x2x128xi32> to vector<2x128xi32>
    %c1_i32 = arith.constant 1 : i32
    %7 = arith.muli %arg1, %c1_i32 : i32
    %8 = arith.addi %7, %arg2 : i32
    %9 = tpu.iota {dimensions = array<i32: 0>} : vector<2x128xi32>
    %10 = tpu.iota {dimensions = array<i32: 1>} : vector<2x128xi32>
    %c2_i32 = arith.constant 2 : i32
    %11 = arith.muli %8, %c2_i32 : i32
    %12 = vector.broadcast %11 : i32 to vector<2x128xi32>
    %13 = arith.addi %12, %9 : vector<2x128xi32>
    %c128_i32 = arith.constant 128 : i32
    %14 = vector.broadcast %c128_i32 : i32 to vector<2x128xi32>
    %15 = arith.muli %13, %14 : vector<2x128xi32>
    %16 = arith.addi %15, %10 : vector<2x128xi32>
    %c256_i32 = arith.constant 256 : i32
    %17 = vector.broadcast %c256_i32 : i32 to vector<2x128xi32>
    %18 = arith.cmpi slt, %16, %17 : vector<2x128xi32>
    %cst = arith.constant dense<0xFF800000> : vector<2x128xf32>
    %19 = vector.multi_reduction <maximumf>, %4, %cst [0] : vector<4x2x128xf32> to vector<2x128xf32>
    %20 = vector.shape_cast %19 : vector<2x128xf32> to vector<1x2x128xf32>
    %21 = vector.broadcast %20 : vector<1x2x128xf32> to vector<4x2x128xf32>
    %22 = arith.subf %4, %21 : vector<4x2x128xf32>
    %23 = math.exp %22 : vector<4x2x128xf32>
    %cst_7 = arith.constant dense<0.000000e+00> : vector<2x128xf32>
    %24 = vector.multi_reduction <add>, %23, %cst_7 [0] : vector<4x2x128xf32> to vector<2x128xf32>
    %25 = math.log %24 : vector<2x128xf32>
    %26 = tpu.reciprocal %24 {approx = true} : vector<2x128xf32> -> vector<2x128xf32>
    %27 = arith.mulf %24, %26 : vector<2x128xf32>
    %cst_8 = arith.constant 2.000000e+00 : f32
    %28 = vector.broadcast %cst_8 : f32 to vector<2x128xf32>
    %29 = arith.subf %28, %27 : vector<2x128xf32>
    %30 = arith.mulf %26, %29 : vector<2x128xf32>
    %31 = tpu.iota {dimensions = array<i32: 0>} : vector<4x128xi32>
    %32 = vector.shape_cast %31 : vector<4x128xi32> to vector<4x1x128xi32>
    %33 = vector.shape_cast %6 : vector<2x128xi32> to vector<1x2x128xi32>
    %34 = vector.broadcast %32 : vector<4x1x128xi32> to vector<4x2x128xi32>
    %35 = vector.broadcast %33 : vector<1x2x128xi32> to vector<4x2x128xi32>
    %36 = arith.cmpi eq, %34, %35 : vector<4x2x128xi32>
    %cst_9 = arith.constant 0.000000e+00 : f32
    %37 = vector.broadcast %cst_9 : f32 to vector<4x2x128xf32>
    %38 = arith.select %36, %4, %37 : vector<4x2x128xi1>, vector<4x2x128xf32>
    %cst_10 = arith.constant dense<0.000000e+00> : vector<2x128xf32>
    %39 = vector.multi_reduction <add>, %38, %cst_10 [0] : vector<4x2x128xf32> to vector<2x128xf32>
    %40 = arith.addf %19, %25 : vector<2x128xf32>
    %41 = arith.subf %40, %39 : vector<2x128xf32>
    %cst_11 = arith.constant 1.000000e-07 : f32
    %42 = vector.broadcast %cst_11 : f32 to vector<2x128xf32>
    %43 = arith.mulf %42, %24 : vector<2x128xf32>
    %44 = vector.shape_cast %43 : vector<2x128xf32> to vector<1x2x128xf32>
    %45 = vector.broadcast %44 : vector<1x2x128xf32> to vector<4x2x128xf32>
    %46 = arith.maximumf %23, %45 : vector<4x2x128xf32>
    %cst_12 = arith.constant dense<0.000000e+00> : vector<2x128xf32>
    %47 = vector.multi_reduction <add>, %46, %cst_12 [0] : vector<4x2x128xf32> to vector<2x128xf32>
    %48 = arith.subf %39, %19 : vector<2x128xf32>
    %49 = math.exp %48 : vector<2x128xf32>
    %50 = arith.maximumf %49, %43 : vector<2x128xf32>
    %51 = arith.subf %47, %50 : vector<2x128xf32>
    %52 = arith.mulf %30, %51 : vector<2x128xf32>
    %cst_13 = arith.constant 1.000000e+00 : f32
    %53 = vector.broadcast %cst_13 : f32 to vector<2x128xf32>
    %54 = arith.mulf %53, %41 : vector<2x128xf32>
    %cst_14 = arith.constant 9.21034049 : f32
    %55 = vector.broadcast %cst_14 : f32 to vector<2x128xf32>
    %56 = arith.mulf %55, %52 : vector<2x128xf32>
    %57 = arith.addf %54, %56 : vector<2x128xf32>
    %c0_15 = arith.constant 0 : index
    %c0_16 = arith.constant 0 : index
    %58 = vector.load %arg6[%c0_15, %c0_16] : memref<2x128xf32, #tpu.memory_space<vmem>>, vector<2x128xf32>
    %cst_17 = arith.constant 0.000000e+00 : f32
    %59 = vector.broadcast %cst_17 : f32 to vector<2x128xf32>
    %60 = arith.select %18, %57, %59 : vector<2x128xi1>, vector<2x128xf32>
    %61 = arith.addf %58, %60 : vector<2x128xf32>
    %c0_18 = arith.constant 0 : index
    %c0_19 = arith.constant 0 : index
    %62 = vector.load %arg6[%c0_18, %c0_19] : memref<2x128xf32, #tpu.memory_space<vmem>>, vector<2x128xf32>
    tpu.vector_store %arg6[%c0_18, %c0_19], %61 {strides = array<i32>} : memref<2x128xf32, #tpu.memory_space<vmem>>, vector<2x128xf32>,
    %c0_i32_20 = arith.constant 0 : i32
    %63 = arith.cmpi eq, %arg2, %c0_i32_20 : i32
    %64 = arith.extui %63 : i1 to i32
    %c0_i32_21 = arith.constant 0 : i32
    %65 = arith.cmpi ne, %64, %c0_i32_21 : i32
    scf.if %65 {
      %c0_22 = arith.constant 0 : index
      %c0_23 = arith.constant 0 : index
      %66 = vector.load %arg6[%c0_22, %c0_23] : memref<2x128xf32, #tpu.memory_space<vmem>>, vector<2x128xf32>
      %cst_24 = arith.constant dense<0.000000e+00> : vector<128xf32>
      %67 = vector.multi_reduction <add>, %66, %cst_24 [0] : vector<2x128xf32> to vector<128xf32>
      %68 = vector.shape_cast %67 : vector<128xf32> to vector<1x128xf32>
      %69 = vector.shape_cast %68 : vector<1x128xf32> to vector<1x1x128xf32>
      %c0_25 = arith.constant 0 : index
      %c0_26 = arith.constant 0 : index
      %c0_27 = arith.constant 0 : index
      %70 = vector.load %arg5[%c0_25, %c0_26, %c0_27] : memref<1x1x128xf32, #tpu.memory_space<vmem>>, vector<1x1x128xf32>
      tpu.vector_store %arg5[%c0_25, %c0_26, %c0_27], %69 {strides = array<i32>} : memref<1x1x128xf32, #tpu.memory_space<vmem>>, vector<1x1x128xf32>,
    } else {
    }
    return
  }
  func.func @transform_0(%arg0: i32, %arg1: i32, %arg2: i32) -> (i32, i32, i32, i32) {
    %c1_i32 = arith.constant 1 : i32
    %0 = arith.muli %arg1, %c1_i32 : i32
    %1 = arith.addi %0, %arg2 : i32
    %c0_i32 = arith.constant 0 : i32
    %2 = arith.minsi %1, %c0_i32 : i32
    %c0_i32_0 = arith.constant 0 : i32
    %c0_i32_1 = arith.constant 0 : i32
    %c0_i32_2 = arith.constant 0 : i32
    return %arg0, %c0_i32_0, %2, %c0_i32_1 : i32, i32, i32, i32
  }
  func.func @transform_1(%arg0: i32, %arg1: i32, %arg2: i32) -> (i32, i32, i32) {
    %c1_i32 = arith.constant 1 : i32
    %0 = arith.muli %arg1, %c1_i32 : i32
    %1 = arith.addi %0, %arg2 : i32
    %c0_i32 = arith.constant 0 : i32
    %2 = arith.minsi %1, %c0_i32 : i32
    %c0_i32_0 = arith.constant 0 : i32
    %c0_i32_1 = arith.constant 0 : i32
    return %arg0, %2, %c0_i32_0 : i32, i32, i32
  }
  func.func @transform_2(%arg0: i32, %arg1: i32, %arg2: i32) -> (i32, i32, i32) {
    %c0_i32 = arith.constant 0 : i32
    %c0_i32_0 = arith.constant 0 : i32
    return %arg0, %arg1, %c0_i32 : i32, i32, i32
  }
}

</mosaic_0001>

<llo_original>
// kernel: tpu_custom_call.1
$region0: #{tpu_custom_call.1}
  #allocation0 [shape = 'u32[]', space=smem, size = 0x4, offset = 0x4, fixed_abs, tag = 'smem constant byte address 0x4 - core index']
  #allocation1 [shape = 'u32[144,128]{1,0:T(1,128)}', space=vmem, size = 0x12000, scoped, tag = 'internal scratch']
  #allocation2 [shape = 'f32[2,128]{1,0:T(2,128)}', space=vmem, size = 0x400, scoped, tag = 'scratch operand']
  %s0 = inlined_call_operand.hbm [shape: f32[2,4,2,128], index: 0, kind: input, shape index: {}]
  %s1 = inlined_call_operand.hbm [shape: s32[2,2,128], index: 1, kind: input, shape index: {}]
  %s2 = inlined_call_operand.hbm [shape: f32[2,1,128], index: 2, kind: output, shape index: {}]
  %s3 = sld [smem:[#allocation0]]
  $region57: #{tpu_custom_call.1} parent=0
    _
  %s5 = ssub.s32 1, %s3
  %s6 = scalar_select 0, %s5, %s3
  $region1: #{tpu_custom_call.1} parent=0
    #allocation3 [shape = 'u8[8192]{0}', space=vmem, size = 0x2000, scoped, tag = 'input window, operand 0']
    #allocation4 [shape = 's32[2]{0}', space=sflag, size = 0x8, scoped, tag = 'scoped memory for tpu_custom_call.1']
    #allocation5 [shape = 's32[2]{0}', space=sflag, size = 0x8, scoped, tag = 'scoped memory for tpu_custom_call.1']
    #allocation6 [shape = 'u8[2048]{0}', space=vmem, size = 0x800, scoped, tag = 'input window, operand 1']
    #allocation7 [shape = 's32[2]{0}', space=sflag, size = 0x8, scoped, tag = 'scoped memory for tpu_custom_call.1']
    #allocation8 [shape = 'u8[1024]{0}', space=vmem, size = 0x400, scoped, tag = 'output window, operand 0']
    %7 = vsyncpa [#allocation4], 0
    %s8 = scalar_lea.sflag [#allocation4], 1
    %9 = vsyncpa %s8, 0
    %10 = vsyncpa [#allocation7], 0
    %s11 = scalar_lea.sflag [#allocation7], 1
    %12 = vsyncpa %s11, 0
    %13 = vsyncpa [#allocation5], 0
    %s14 = scalar_lea.sflag [#allocation5], 1
    %15 = vsyncpa %s14, 0
    loop: start=0, step=1, limit=4
    $region2: #{tpu_custom_call.1} parent=1 // loop_pre_header
      _
    $region3: #{tpu_custom_call.1} parent=1 // loop_header
      %s17 = sphi 0, %s21
      %p18 = scmp.ge.s32.totalorder %s17, 4
      %s24 = sphi 0, %s43
      %s25 = sphi 0, %s39
      %s26 = sphi 0, %s35
      %s27 = sphi 0, %s24
      %s28 = sphi 0, %s25
      %s29 = sphi 0, %s26
      %s30 = sphi 0, %s27
      %s31 = sphi 0, %s28
      %s32 = sphi 0, %s29
      %s54 = sphi 0, %s56
      %s57 = sphi 0, %s54
      %s58 = sphi 0, %s57
      %s74 = sphi 0, %s58
      %s88 = sphi 0, %s90
      %s91 = sphi 0, %s88
      %s92 = sphi 0, %s91
      %s108 = sphi 0, %s92
      %s116 = sphi 0, %s118
      %s119 = sphi 0, %s116
      %s120 = sphi 0, %s119
      %s136 = sphi 0, %s120
    $region4: #{tpu_custom_call.1} parent=1 // loop_header_branch
      %20 = sbr.rel (%p18) target = $region8
    $region5: #{tpu_custom_call.1} parent=1 // loop_body
      %s22 = ssub.s32 %s17, 1
      %s23 = ssub.s32 %s17, 2
      %s33 = sadd.s32 1, %s26
      %p34 = scmp.ge.s32.totalorder %s33, 1
      %s35 = scalar_select %p34, 0, %s33
      %s36 = sadd.s32 1, %s25
      %s37 = scalar_select %p34, %s36, %s25
      %p38 = scmp.ge.s32.totalorder %s37, 1
      %s39 = scalar_select %p38, 0, %s37
      %s40 = sadd.s32 1, %s24
      %s41 = scalar_select %p38, %s40, %s24
      %p42 = scmp.ge.s32.totalorder %s41, 2
      %s43 = scalar_select %p42, 0, %s41
      %s44 = sadd.s32 %s25, %s26
      %p45 = scmp.lt.s32.totalorder %s44, 0
      %s46 = scalar_select %p45, %s44, 0
      %s47 = sadd.s32 %s39, %s35
      %p48 = scmp.lt.s32.totalorder %s47, 0
      %s49 = scalar_select %p48, %s47, 0
      %s50 = ssub.s32 %s24, %s43
      %s51 = ssub.s32 %s46, %s49
      %s52 = sor.u32 %s50, %s51
      %p53 = scmp.eq.s32.totalorder %s52, 0
      %s55 = sadd.s32 %s54, 1
      %s56 = scalar_select %p53, %s54, %s55
      %p59 = pneg %p53
      %p60 = scmp.eq.s32.totalorder %s17, 1
      %p61 = por %p59, %p60
      %p62 = scmp.ne.s32.totalorder %s54, %s57
      %p63 = scmp.eq.s32.totalorder %s17, 0
      %p64 = por %p62, %p63
      %p65 = scmp.ne.s32.totalorder %s54, %s57
      %p66 = scmp.eq.s32.totalorder %s22, 1
      %p67 = por %p65, %p66
      %p68 = scmp.ne.s32.totalorder %s57, %s58
      %p69 = scmp.eq.s32.totalorder %s22, 0
      %p70 = por %p68, %p69
      %p71 = scmp.ne.s32.totalorder %s57, %s58
      %p72 = scmp.eq.s32.totalorder %s23, 1
      %p73 = por %p71, %p72
      %p75 = scmp.ne.s32.totalorder %s58, %s74
      %p76 = scmp.eq.s32.totalorder %s23, 0
      %p77 = por %p75, %p76
      %s78 = sadd.s32 %s25, %s26
      %p79 = scmp.lt.s32.totalorder %s78, 0
      %s80 = scalar_select %p79, %s78, 0
      %s81 = sadd.s32 %s39, %s35
      %p82 = scmp.lt.s32.totalorder %s81, 0
      %s83 = scalar_select %p82, %s81, 0
      %s84 = ssub.s32 %s24, %s43
      %s85 = ssub.s32 %s80, %s83
      %s86 = sor.u32 %s84, %s85
      %p87 = scmp.eq.s32.totalorder %s86, 0
      %s89 = sadd.s32 %s88, 1
      %s90 = scalar_select %p87, %s88, %s89
      %p93 = pneg %p87
      %p94 = scmp.eq.s32.totalorder %s17, 1
      %p95 = por %p93, %p94
      %p96 = scmp.ne.s32.totalorder %s88, %s91
      %p97 = scmp.eq.s32.totalorder %s17, 0
      %p98 = por %p96, %p97
      %p99 = scmp.ne.s32.totalorder %s88, %s91
      %p100 = scmp.eq.s32.totalorder %s22, 1
      %p101 = por %p99, %p100
      %p102 = scmp.ne.s32.totalorder %s91, %s92
      %p103 = scmp.eq.s32.totalorder %s22, 0
      %p104 = por %p102, %p103
      %p105 = scmp.ne.s32.totalorder %s91, %s92
      %p106 = scmp.eq.s32.totalorder %s23, 1
      %p107 = por %p105, %p106
      %p109 = scmp.ne.s32.totalorder %s92, %s108
      %p110 = scmp.eq.s32.totalorder %s23, 0
      %p111 = por %p109, %p110
      %s112 = ssub.s32 %s24, %s43
      %s113 = ssub.s32 %s25, %s39
      %s114 = sor.u32 %s112, %s113
      %p115 = scmp.eq.s32.totalorder %s114, 0
      %s117 = sadd.s32 %s116, 1
      %s118 = scalar_select %p115, %s116, %s117
      %p121 = pneg %p115
      %p122 = scmp.eq.s32.totalorder %s17, 1
      %p123 = por %p121, %p122
      %p124 = scmp.ne.s32.totalorder %s116, %s119
      %p125 = scmp.eq.s32.totalorder %s17, 0
      %p126 = por %p124, %p125
      %p127 = scmp.ne.s32.totalorder %s116, %s119
      %p128 = scmp.eq.s32.totalorder %s22, 1
      %p129 = por %p127, %p128
      %p130 = scmp.ne.s32.totalorder %s119, %s120
      %p131 = scmp.eq.s32.totalorder %s22, 0
      %p132 = por %p130, %p131
      %p133 = scmp.ne.s32.totalorder %s119, %s120
      %p134 = scmp.eq.s32.totalorder %s23, 1
      %p135 = por %p133, %p134
      %p137 = scmp.ne.s32.totalorder %s120, %s136
      %p138 = scmp.eq.s32.totalorder %s23, 0
      %p139 = por %p137, %p138
      %p140 = scmp.le.s32.totalorder 1, %s17
      %p141 = scmp.lt.s32.totalorder %s17, 3
      %p142 = pnand %p140, %p141
      %p143 = pneg %p142
      // Predicated region
      $region9: #{tpu_custom_call.1} parent=5 // pred_check
        _
      $region10: #{tpu_custom_call.1} parent=5 // pred_check_branch
        %145 = sbr.rel (%p142) target = $region12
      $region11: #{tpu_custom_call.1} parent=5 // pred_region
        %s146 = ssub.s32 %s17, 1
      $region12: #{tpu_custom_call.1} parent=5 // pred_fallthru
        _
      %p147 = scmp.lt.s32.totalorder %s17, 2
      // Predicated region
      $region13: #{tpu_custom_call.1} parent=5 // pred_check
        %p148 = pneg %p147
      $region14: #{tpu_custom_call.1} parent=5 // pred_check_branch
        %150 = sbr.rel (%p148) target = $region16
      $region15: #{tpu_custom_call.1} parent=5 // pred_region
        // Predicated region
        $region17: #{tpu_custom_call.1} parent=15 // pred_check
          %p151 = pneg %p64
        $region18: #{tpu_custom_call.1} parent=15 // pred_check_branch
          %153 = sbr.rel (%p151) target = $region20
        $region19: #{tpu_custom_call.1} parent=15 // pred_region
          %s154 = sand.u32 %s54, 1
          %s155 = scalar_lea.sflag [#allocation4], %s154
          %s156 = sand.u32 %s54, 1
          %s157 = smul.addr %s156, 8
          %s158 = scalar_lea.vmem [#allocation3], %s157
          %s159 = sadd.s32 %s25, %s26
          %p160 = scmp.lt.s32.totalorder %s159, 0
          %s161 = scalar_select %p160, %s159, 0
          %s163 = ssub.s32 128, 128
          %164 = vsyncadd %s155, %s163
          %s165 = smul.addr %s24, 4
          %s166 = sadd.s32 %s161, %s165
          %s167 = smul.addr %s166, 32
          %s168 = scalar_lea.hbm %s0, %s167
          %s169 = sshll.u32 %s158, 4
          %s170 = int_to_ptr.vmem [resolvable:$true] %s169
          %175 = dma.hbm_to_vmem [thread:$0]  %s168, 128, %s170, %s155, 32, 32, 2
        $region20: #{tpu_custom_call.1} parent=15 // pred_fallthru
          _
        // Predicated region
        $region21: #{tpu_custom_call.1} parent=15 // pred_check
          %p176 = pneg %p98
        $region22: #{tpu_custom_call.1} parent=15 // pred_check_branch
          %178 = sbr.rel (%p176) target = $region24
        $region23: #{tpu_custom_call.1} parent=15 // pred_region
          %s179 = sand.u32 %s88, 1
          %s180 = scalar_lea.sflag [#allocation7], %s179
          %s181 = sand.u32 %s88, 1
          %s182 = smul.addr %s181, 2
          %s183 = scalar_lea.vmem [#allocation6], %s182
          %s184 = sadd.s32 %s25, %s26
          %p185 = scmp.lt.s32.totalorder %s184, 0
          %s186 = scalar_select %p185, %s184, 0
          %s188 = ssub.s32 32, 32
          %189 = vsyncadd %s180, %s188
          %s190 = sadd.s32 %s186, %s24
          %s191 = smul.addr %s190, 32
          %s192 = scalar_lea.hbm %s1, %s191
          %s194 = sshll.u32 %s183, 4
          %s195 = int_to_ptr.vmem [resolvable:$true] %s194
          %197 = dma.hbm_to_vmem [thread:$0]  %s192, 32, %s195, %s180
        $region24: #{tpu_custom_call.1} parent=15 // pred_fallthru
          _
      $region16: #{tpu_custom_call.1} parent=5 // pred_fallthru
        _
      %p198 = scmp.le.s32.totalorder 1, %s17
      %p199 = scmp.lt.s32.totalorder %s17, 3
      %p200 = pnand %p198, %p199
      %p201 = pneg %p200
      // Predicated region
      $region25: #{tpu_custom_call.1} parent=5 // pred_check
        _
      $region26: #{tpu_custom_call.1} parent=5 // pred_check_branch
        %203 = sbr.rel (%p200) target = $region28
      $region27: #{tpu_custom_call.1} parent=5 // pred_region
        %s204 = ssub.s32 %s17, 1
        %s205 = sand.u32 %s57, 1
        %s206 = scalar_lea.sflag [#allocation4], %s205
        %s207 = sand.u32 %s57, 1
        %s208 = smul.addr %s207, 8
        %s209 = scalar_lea.vmem [#allocation3], %s208
        // Predicated region
        $region29: #{tpu_custom_call.1} parent=27 // pred_check
          %p210 = pneg %p70
        $region30: #{tpu_custom_call.1} parent=27 // pred_check_branch
          %212 = sbr.rel (%p210) target = $region32
        $region31: #{tpu_custom_call.1} parent=27 // pred_region
          %213 = dma.done %s206, 128
        $region32: #{tpu_custom_call.1} parent=27 // pred_fallthru
          _
        %s214 = sand.u32 %s91, 1
        %s215 = scalar_lea.sflag [#allocation7], %s214
        %s216 = sand.u32 %s91, 1
        %s217 = smul.addr %s216, 2
        %s218 = scalar_lea.vmem [#allocation6], %s217
        // Predicated region
        $region33: #{tpu_custom_call.1} parent=27 // pred_check
          %p219 = pneg %p104
        $region34: #{tpu_custom_call.1} parent=27 // pred_check_branch
          %221 = sbr.rel (%p219) target = $region36
        $region35: #{tpu_custom_call.1} parent=27 // pred_region
          %222 = dma.done %s215, 32
        $region36: #{tpu_custom_call.1} parent=27 // pred_fallthru
          _
        %s223 = sand.u32 %s57, 1
        %s224 = scalar_lea.sflag [#allocation4], %s223
        %s225 = sand.u32 %s57, 1
        %s226 = smul.addr %s225, 8
        %s227 = scalar_lea.vmem [#allocation3], %s226
        %p228 = pneg %p70
        %p229 = pneg %p67
        %s230 = sand.u32 %s91, 1
        %s231 = scalar_lea.sflag [#allocation7], %s230
        %s232 = sand.u32 %s91, 1
        %s233 = smul.addr %s232, 2
        %s234 = scalar_lea.vmem [#allocation6], %s233
        %p235 = pneg %p104
        %p236 = pneg %p101
        %p237 = pneg %p132
        %p238 = pneg %p129
        %s239 = sand.u32 %s119, 1
        %s240 = scalar_lea.sflag [#allocation5], %s239
        %s241 = sand.u32 %s119, 1
        %s242 = scalar_lea.vmem [#allocation8], %s241
        %s243 = sadd.s32 %s28, %s29
        %p244 = scmp.lt.s32.totalorder %s243, 0
        %s245 = scalar_select %p244, %s243, 0
        %s246 = sadd.s32 %s28, %s29
        %p247 = scmp.lt.s32.totalorder %s246, 0
        %s248 = scalar_select %p247, %s246, 0
        %p249 = scmp.eq.s32.totalorder %s29, 0
        // Predicated region
        $region37: #{tpu_custom_call.1} parent=27 // pred_check
          %p250 = pneg %p249
        $region38: #{tpu_custom_call.1} parent=27 // pred_check_branch
          %252 = sbr.rel (%p250) target = $region40
        $region39: #{tpu_custom_call.1} parent=27 // pred_region
          %253 = vst [vmem:[#allocation2] sm:$0x3] 0.0
        $region40: #{tpu_custom_call.1} parent=27 // pred_fallthru
          _
        %v254 = vld [vmem:[%s209] sm:$0x3]
        %v255 = vld [vmem:[%s209 + $0x2] sm:$0x3]
        %v256 = vld [vmem:[%s209 + $0x4] sm:$0x3]
        %v257 = vld [vmem:[%s209 + $0x6] sm:$0x3]
        %v258 = vld [vmem:[%s218] sm:$0x3]
        %s259 = sadd.s32 %s28, %s29
        %v260 = vlaneseq
        %v261 = vshrl.u32 %v260, 7
        %v262 = vlaneseq
        %v263 = vand.u32 %v262, 127
        %s264 = smul.u32 %s259, 2
        %v265 = vstv %s264
        %v266 = vadd.s32 %v265, %v261
        %v267 = vmul.u32 %v266, 128
        %v268 = vadd.s32 %v267, %v263
        %vm269 = vcmp.lt.s32.totalorder %v268, 256
        %vm270 = vcmask 1041408
        %v271 = vsel %vm270, %v254, -inf
        %v272 = vsel %vm270, %v255, -inf
        %v273 = vsel %vm270, %v256, -inf
        %v274 = vsel %vm270, %v257, -inf
        %v275 = vmax.f32 %v271, %v272
        %v276 = vmax.f32 %v273, %v274
        %v277 = vmax.f32 %v275, %v276
        %v278 = vsub.f32 %v254, %v277
        %v279 = vsub.f32 %v255, %v277
        %v280 = vsub.f32 %v256, %v277
        %v281 = vsub.f32 %v257, %v277
        %v282 = vmul.f32 %v278, 1.442695
        %v283 = vpow.pop %v282
        %v284 = vmul.f32 %v279, 1.442695
        %v285 = vpow.pop %v284
        %v286 = vmul.f32 %v280, 1.442695
        %v287 = vpow.pop %v286
        %v288 = vmul.f32 %v281, 1.442695
        %v289 = vpow.pop %v288
        %v290 = vsel %vm270, %v283, 0.0
        %v291 = vsel %vm270, %v285, 0.0
        %v292 = vadd.f32 %v290, %v291
        %v293 = vsel %vm270, %v287, 0.0
        %v294 = vadd.f32 %v292, %v293
        %v295 = vsel %vm270, %v289, 0.0
        %v296 = vadd.f32 %v294, %v295
        %v297 = vlog2.pop %v296
        %v298 = vmul.f32 %v297, 0.6931472
        %v299 = vrcp.pop %v296
        %v300 = vmul.f32 %v296, %v299
        %v301 = vsub.f32 2.0, %v300
        %v302 = vmul.f32 %v299, %v301
        %v303 = vlaneseq
        %v304 = vshrl.u32 %v303, 7
        %v305 = vsub.s32 0, %v304
        %v306 = vrot.slane %v261, %v305
        %v307 = vlaneseq
        %v308 = vshrl.u32 %v307, 7
        %v309 = vsub.s32 1, %v308
        %v310 = vrot.slane %v261, %v309
        %v311 = vlaneseq
        %v312 = vshrl.u32 %v311, 7
        %v313 = vsub.s32 2, %v312
        %v314 = vrot.slane %v261, %v313
        %v315 = vlaneseq
        %v316 = vshrl.u32 %v315, 7
        %v317 = vsub.s32 3, %v316
        %v318 = vrot.slane %v261, %v317
        %vm319 = vcmp.eq.s32.totalorder %v306, %v258
        %vm320 = vcmp.eq.s32.totalorder %v310, %v258
        %vm321 = vcmp.eq.s32.totalorder %v314, %v258
        %vm322 = vcmp.eq.s32.totalorder %v318, %v258
        %v323 = vsel %vm319, %v254, 0.0
        %v324 = vsel %vm320, %v255, 0.0
        %v325 = vsel %vm321, %v256, 0.0
        %v326 = vsel %vm322, %v257, 0.0
        %v327 = vsel %vm270, %v323, 0.0
        %v328 = vsel %vm270, %v324, 0.0
        %v329 = vadd.f32 %v327, %v328
        %v330 = vsel %vm270, %v325, 0.0
        %v331 = vadd.f32 %v329, %v330
        %v332 = vsel %vm270, %v326, 0.0
        %v333 = vadd.f32 %v331, %v332
        %v334 = vadd.f32 %v277, %v298
        %v335 = vsub.f32 %v334, %v333
        %v336 = vmul.f32 %v296, 1e-07
        %v337 = vmax.f32 %v283, %v336
        %v338 = vmax.f32 %v285, %v336
        %v339 = vmax.f32 %v287, %v336
        %v340 = vmax.f32 %v289, %v336
        %v341 = vsel %vm270, %v337, 0.0
        %v342 = vsel %vm270, %v338, 0.0
        %v343 = vadd.f32 %v341, %v342
        %v344 = vsel %vm270, %v339, 0.0
        %v345 = vadd.f32 %v343, %v344
        %v346 = vsel %vm270, %v340, 0.0
        %v347 = vadd.f32 %v345, %v346
        %v348 = vsub.f32 %v333, %v277
        %v349 = vmul.f32 %v348, 1.442695
        %v350 = vpow.pop %v349
        %v351 = vmax.f32 %v350, %v336
        %v352 = vsub.f32 %v347, %v351
        %v353 = vmul.f32 %v302, %v352
        %v354 = vmul.f32 %v353, 9.2103405
        %v355 = vadd.f32 %v335, %v354
        %v356 = vld [vmem:[#allocation2] sm:$0x3]
        %v357 = vsel %vm269, %v355, 0.0
        %v358 = vadd.f32 %v356, %v357
        %359 = vst [vmem:[#allocation2] sm:$0x3] %v358
        // Predicated region
        $region41: #{tpu_custom_call.1} parent=27 // pred_check
          %p360 = pneg %p249
        $region42: #{tpu_custom_call.1} parent=27 // pred_check_branch
          %362 = sbr.rel (%p360) target = $region44
        $region43: #{tpu_custom_call.1} parent=27 // pred_region
          %v363 = vld [vmem:[#allocation2] sm:$0x3]
          %v364 = vsel %vm270, %v363, 0.0
          %v365 = vrot.slane %v364, 4
          %v366 = vadd.f32 %v364, %v365
          %v367 = vrot.slane %v366, 2
          %v368 = vadd.f32 %v366, %v367
          %v369 = vrot.slane %v368, 1
          %v370 = vadd.f32 %v368, %v369
          %371 = vst [vmem:[%s242] sm:$0x1] %v370
        $region44: #{tpu_custom_call.1} parent=27 // pred_fallthru
          _
        %s372 = sand.u32 %s119, 1
        %s373 = scalar_lea.sflag [#allocation5], %s372
        %s374 = sand.u32 %s119, 1
        %s375 = scalar_lea.vmem [#allocation8], %s374
        // Predicated region
        $region45: #{tpu_custom_call.1} parent=27 // pred_check
          %p376 = pneg %p129
        $region46: #{tpu_custom_call.1} parent=27 // pred_check_branch
          %378 = sbr.rel (%p376) target = $region48
        $region47: #{tpu_custom_call.1} parent=27 // pred_region
          %s380 = ssub.s32 16, 16
          %381 = vsyncadd %s373, %s380
          %s382 = sadd.s32 %s28, %s27
          %s383 = smul.addr %s382, 16
          %s384 = scalar_lea.hbm %s2, %s383
          %s386 = sshll.u32 %s375, 4
          %s387 = int_to_ptr.vmem [resolvable:$true] %s386
          %389 = dma.vmem_to_hbm [thread:$0]  %s387, 16, %s384, %s373
        $region48: #{tpu_custom_call.1} parent=27 // pred_fallthru
          _
      $region28: #{tpu_custom_call.1} parent=5 // pred_fallthru
        _
      %p390 = scmp.le.s32.totalorder 2, %s17
      // Predicated region
      $region49: #{tpu_custom_call.1} parent=5 // pred_check
        %p391 = pneg %p390
      $region50: #{tpu_custom_call.1} parent=5 // pred_check_branch
        %393 = sbr.rel (%p391) target = $region52
      $region51: #{tpu_custom_call.1} parent=5 // pred_region
        %s394 = ssub.s32 %s17, 2
        // Predicated region
        $region53: #{tpu_custom_call.1} parent=51 // pred_check
          %p395 = pneg %p135
        $region54: #{tpu_custom_call.1} parent=51 // pred_check_branch
          %397 = sbr.rel (%p395) target = $region56
        $region55: #{tpu_custom_call.1} parent=51 // pred_region
          %s398 = sand.u32 %s120, 1
          %s399 = scalar_lea.sflag [#allocation5], %s398
          %s400 = sand.u32 %s120, 1
          %s401 = scalar_lea.vmem [#allocation8], %s400
          %402 = dma.done %s399, 16
        $region56: #{tpu_custom_call.1} parent=51 // pred_fallthru
          _
      $region52: #{tpu_custom_call.1} parent=5 // pred_fallthru
        _
    $region6: #{tpu_custom_call.1} parent=1 // loop_footer
      %s21 = sadd.s32 1, %s17
    $region7: #{tpu_custom_call.1} parent=1 // loop_footer_branch
      %16 = sbr.rel target = $region3
    $region8: #{tpu_custom_call.1} parent=1 // loop_exit
      _
    %403 = vsyncpa [#allocation4], 1
    %s404 = scalar_lea.sflag [#allocation4], 1
    %405 = vsyncpa %s404, 1
    %406 = vsyncpa [#allocation7], 1
    %s407 = scalar_lea.sflag [#allocation7], 1
    %408 = vsyncpa %s407, 1
    %409 = vsyncpa [#allocation5], 1
    %s410 = scalar_lea.sflag [#allocation5], 1
    %411 = vsyncpa %s410, 1

</llo_original>
